<compile_context>
chip_gen: v5e
topology: v5e:2x2
jax: 0.10.0
libtpu: 0.0.40
codegen_flags: <defaults>
</compile_context>

<pallas_src>
import functools

import jax
import jax.numpy as jnp
import numpy as np
from jax.experimental import pallas as pl
from jax.experimental.pallas import tpu as pltpu


def encoder_kernel(emb_ref, wih_ref, whh_ref, b_ref,
                   out_ref, hn_ref, cn_ref,
                   xproj_scr):
    """emb_ref : (L*B, E)  time-major flattened embeddings (batch pre-padded).
    wih_ref : (E, 4H), whh_ref: (H, 4H), b_ref: (1, 4H).
        Gate columns already permuted to [i, f, o, g] and the i/f/o columns
        pre-scaled by 0.5 so sigmoid(x) == 0.5*tanh(col)+0.5.
    out_ref : (B, L*H) packed batch-major hidden states.
    hn_ref / cn_ref : (B, H).  xproj_scr: (L*B, 4H)."""
    B, H = hn_ref.shape
    L = out_ref.shape[1] // H

    # One batched MXU matmul for the input projection of every timestep,
    # bias folded in once (off the recurrent critical path).
    xproj_scr[...] = (
        jnp.dot(emb_ref[...], wih_ref[...], preferred_element_type=jnp.float32)
        + b_ref[...])

    # Hoisted weight read: w_hh (H x 4H) stays resident in the vreg file.
    whh = whh_ref[...]

    h = jnp.zeros((B, H), jnp.float32)
    c = jnp.zeros((B, H), jnp.float32)

    # Fully unrolled recurrence (L is small & static) -> all slices static,
    # LLO can overlap step t's EUP latency with step t+1's matmul.
    for t in range(L):
        x_row = xproj_scr[t * B:(t + 1) * B, :]                    # (B, 4H)
        gates = x_row + jnp.dot(h, whh, preferred_element_type=jnp.float32)

        # Single whole-vreg EUP push: tanh over all 4H columns.
        t_all = jnp.tanh(gates)
        sig = 0.5 * t_all[:, :3 * H] + 0.5     # sigmoid(i,f,o) via tanh (VPU)
        i_g = sig[:, 0:H]
        f_g = sig[:, H:2 * H]
        o_g = sig[:, 2 * H:3 * H]
        g_g = t_all[:, 3 * H:]                 # tanh gate g

        c = f_g * c + i_g * g_g
        h = o_g * jnp.tanh(c)
        out_ref[:, t * H:(t + 1) * H] = h      # packed batch-major store

    hn_ref[...] = h
    cn_ref[...] = c


def init_params(key, input_size, emb_dim, hidden_size):
    ks = jax.random.split(key, 5)

    def w(k, shape, scale=0.1):
        return jax.random.normal(k, shape, jnp.float32) * scale

    return {
        'emb_table': w(ks[0], (input_size, emb_dim), 1.0),
        'w_ih': w(ks[1], (4 * hidden_size, emb_dim)),       # PyTorch order i,f,g,o
        'w_hh': w(ks[2], (4 * hidden_size, hidden_size)),
        'b_ih': w(ks[3], (4 * hidden_size,)),
        'b_hh': w(ks[4], (4 * hidden_size,)),
    }


def encoder_forward(params, x, *, hidden_size):
    """Matches Encoder.forward: returns (output, (hn, cn))."""
    B, ep_len, seq_len = x.shape
    L = ep_len * seq_len
    H = hidden_size
    E = params['emb_table'].shape[1]
    B_pad = max(8, ((B + 7) // 8) * 8)            # sublane-dense batch

    # ---- glue: time-major embedding gather (transpose the tiny token matrix,
    #            not the float embeddings) ----
    tokens_tm = x.reshape(B, L).T                                   # (L, B) int
    emb_tm = jnp.take(params['emb_table'], tokens_tm, axis=0)       # (L, B, E)
    emb_tm = jnp.pad(emb_tm.astype(jnp.float32),
                     ((0, 0), (0, B_pad - B), (0, 0)))              # (L, B_pad, E)
    emb_flat = emb_tm.reshape(L * B_pad, E)

    # ---- gate-column permutation [i,f,g,o] -> [i,f,o,g] and 0.5 pre-scale of
    #      the sigmoid columns, folded into the weights / bias ----
    perm = np.concatenate([np.arange(0, H), np.arange(H, 2 * H),
                           np.arange(3 * H, 4 * H), np.arange(2 * H, 3 * H)])
    col_scale = np.concatenate([np.full(3 * H, 0.5, np.float32),
                                np.ones(H, np.float32)])
    wih = params['w_ih'].T.astype(jnp.float32)[:, perm] * col_scale       # (E, 4H)
    whh = params['w_hh'].T.astype(jnp.float32)[:, perm] * col_scale       # (H, 4H)
    b = ((params['b_ih'] + params['b_hh']).astype(jnp.float32)[perm]
         * col_scale)[None, :]                                            # (1, 4H)

    # Explicit VMEM budget (works within v7x's 64 MiB as well as v5e/v6e).
    work_bytes = 4 * (L * B_pad * E + E * 4 * H + H * 4 * H + 4 * H
                      + B_pad * L * H + 2 * B_pad * H + L * B_pad * 4 * H)
    vmem_limit = int(min(64 << 20, max(4 << 20, 2 * work_bytes + (2 << 20))))

    vmem = pl.BlockSpec(memory_space=pltpu.MemorySpace.VMEM)
    out_pk, hn_pad, cn_pad = pl.pallas_call(
        encoder_kernel,
        out_shape=(jax.ShapeDtypeStruct((B_pad, L * H), jnp.float32),
                   jax.ShapeDtypeStruct((B_pad, H), jnp.float32),
                   jax.ShapeDtypeStruct((B_pad, H), jnp.float32)),
        in_specs=[vmem] * 4,
        out_specs=(vmem, vmem, vmem),
        scratch_shapes=[pltpu.VMEM((L * B_pad, 4 * H), jnp.float32)],
        compiler_params=pltpu.CompilerParams(vmem_limit_bytes=vmem_limit),
    )(emb_flat, wih, whh, b)

    # Free contiguous reshape (no HBM transpose), then strip batch padding.
    output = out_pk.reshape(B_pad, L, H)[:B]                        # (B, L, H)
    hn = hn_pad[:B][None, :, :]                                     # (1, B, H)
    cn = cn_pad[:B][None, :, :]                                     # (1, B, H)
    return output, (hn, cn)


def reference_forward(params, x, hidden_size):
    """Pure-JAX reference matching the PyTorch Encoder (nn.Embedding + nn.LSTM)."""
    H = hidden_size
    B, ep_len, seq_len = x.shape
    L = ep_len * seq_len
    emb = params['emb_table'][x.reshape(B, L)]                      # (B, L, E)
    h = jnp.zeros((B, H), jnp.float32)
    c = jnp.zeros((B, H), jnp.float32)
    outs = []
    for t in range(L):
        gates = (emb[:, t] @ params['w_ih'].T + h @ params['w_hh'].T
                 + params['b_ih'] + params['b_hh'])
        i = jax.nn.sigmoid(gates[:, :H])
        f = jax.nn.sigmoid(gates[:, H:2 * H])
        g = jnp.tanh(gates[:, 2 * H:3 * H])
        o = jax.nn.sigmoid(gates[:, 3 * H:])
        c = f * c + i * g
        h = o * jnp.tanh(c)
        outs.append(h)
    output = jnp.stack(outs, axis=1)                                # (B, L, H)
    return output, (h[None], c[None])


if __name__ == "__main__":
    key = jax.random.PRNGKey(0)
    input_size, emb_dim, hidden_size = 20, 16, 32
    B, ep_len, seq_len = 2, 2, 4

    kp, kx = jax.random.split(key, 2)
    params = init_params(kp, input_size, emb_dim, hidden_size)
    x = jax.random.randint(kx, (B, ep_len, seq_len), 0, input_size, jnp.int32)

    fwd = jax.jit(functools.partial(encoder_forward, hidden_size=hidden_size))
    output, (hn, cn) = fwd(params, x)
    jax.block_until_ready((output, hn, cn))

    ref_out, (ref_hn, ref_cn) = reference_forward(params, x, hidden_size)
    np.testing.assert_allclose(np.asarray(output), np.asarray(ref_out),
                               atol=2e-3, rtol=2e-2)
    np.testing.assert_allclose(np.asarray(hn), np.asarray(ref_hn),
                               atol=2e-3, rtol=2e-2)
    np.testing.assert_allclose(np.asarray(cn), np.asarray(ref_cn),
                               atol=2e-3, rtol=2e-2)
    print("KERNEL_OK")
</pallas_src>

<mosaic_0001>
module attributes {stable_mosaic.version = 11 : i64} {
  func.func @encoder_kernel(%arg0: memref<64x16xf32, #tpu.memory_space<vmem>>, %arg1: memref<16x128xf32, #tpu.memory_space<vmem>>, %arg2: memref<32x128xf32, #tpu.memory_space<vmem>>, %arg3: memref<1x128xf32, #tpu.memory_space<vmem>>, %arg4: memref<8x256xf32, #tpu.memory_space<vmem>>, %arg5: memref<8x32xf32, #tpu.memory_space<vmem>>, %arg6: memref<8x32xf32, #tpu.memory_space<vmem>>, %arg7: memref<64x128xf32, #tpu.memory_space<vmem>>) attributes {dimension_semantics = [], scalar_prefetch = 0 : i64, scratch_operands = 1 : i64, tpu.core_type = #tpu.core_type<tc>} {
    %c0 = arith.constant 0 : index
    %c0_0 = arith.constant 0 : index
    %0 = vector.load %arg0[%c0, %c0_0] : memref<64x16xf32, #tpu.memory_space<vmem>>, vector<64x16xf32>
    %c0_1 = arith.constant 0 : index
    %c0_2 = arith.constant 0 : index
    %1 = vector.load %arg1[%c0_1, %c0_2] : memref<16x128xf32, #tpu.memory_space<vmem>>, vector<16x128xf32>
    %cst = arith.constant dense<0.000000e+00> : vector<64x128xf32>
    %2 = tpu.matmul %0, %1, %cst {dimension_numbers = #tpu.dot_dimension_numbers<[1], [0], [0], [1], [0, 0, 1, 1], [], []>} : vector<64x16xf32>, vector<16x128xf32>, vector<64x128xf32> -> vector<64x128xf32>
    %c0_3 = arith.constant 0 : index
    %c0_4 = arith.constant 0 : index
    %3 = vector.load %arg3[%c0_3, %c0_4] : memref<1x128xf32, #tpu.memory_space<vmem>>, vector<1x128xf32>
    %4 = vector.broadcast %3 : vector<1x128xf32> to vector<64x128xf32>
    %5 = arith.addf %2, %4 : vector<64x128xf32>
    %c0_5 = arith.constant 0 : index
    %c0_6 = arith.constant 0 : index
    %6 = vector.load %arg7[%c0_5, %c0_6] : memref<64x128xf32, #tpu.memory_space<vmem>>, vector<64x128xf32>
    tpu.vector_store %arg7[%c0_5, %c0_6], %5 {strides = array<i32>} : memref<64x128xf32, #tpu.memory_space<vmem>>, vector<64x128xf32>,
    %c0_7 = arith.constant 0 : index
    %c0_8 = arith.constant 0 : index
    %7 = vector.load %arg2[%c0_7, %c0_8] : memref<32x128xf32, #tpu.memory_space<vmem>>, vector<32x128xf32>
    %cst_9 = arith.constant 0.000000e+00 : f32
    %8 = vector.broadcast %cst_9 : f32 to vector<8x32xf32>
    %cst_10 = arith.constant 0.000000e+00 : f32
    %9 = vector.broadcast %cst_10 : f32 to vector<8x32xf32>
    %c0_11 = arith.constant 0 : index
    %c0_12 = arith.constant 0 : index
    %10 = vector.load %arg7[%c0_11, %c0_12] : memref<64x128xf32, #tpu.memory_space<vmem>>, vector<8x128xf32>
    %cst_13 = arith.constant dense<0.000000e+00> : vector<8x128xf32>
    %11 = tpu.matmul %8, %7, %cst_13 {dimension_numbers = #tpu.dot_dimension_numbers<[1], [0], [0], [1], [0, 0, 1, 1], [], []>} : vector<8x32xf32>, vector<32x128xf32>, vector<8x128xf32> -> vector<8x128xf32>
    %12 = arith.addf %10, %11 : vector<8x128xf32>
    %13 = math.tanh %12 : vector<8x128xf32>
    %14 = vector.extract_strided_slice %13 {offsets = [0, 0], sizes = [8, 96], strides = [1, 1]} : vector<8x128xf32> to vector<8x96xf32>
    %cst_14 = arith.constant 5.000000e-01 : f32
    %15 = vector.broadcast %cst_14 : f32 to vector<8x96xf32>
    %16 = arith.mulf %15, %14 : vector<8x96xf32>
    %cst_15 = arith.constant 5.000000e-01 : f32
    %17 = vector.broadcast %cst_15 : f32 to vector<8x96xf32>
    %18 = arith.addf %16, %17 : vector<8x96xf32>
    %19 = vector.extract_strided_slice %18 {offsets = [0, 0], sizes = [8, 32], strides = [1, 1]} : vector<8x96xf32> to vector<8x32xf32>
    %20 = vector.extract_strided_slice %18 {offsets = [0, 32], sizes = [8, 32], strides = [1, 1]} : vector<8x96xf32> to vector<8x32xf32>
    %21 = vector.extract_strided_slice %18 {offsets = [0, 64], sizes = [8, 32], strides = [1, 1]} : vector<8x96xf32> to vector<8x32xf32>
    %22 = vector.extract_strided_slice %13 {offsets = [0, 96], sizes = [8, 32], strides = [1, 1]} : vector<8x128xf32> to vector<8x32xf32>
    %23 = arith.mulf %20, %9 : vector<8x32xf32>
    %24 = arith.mulf %19, %22 : vector<8x32xf32>
    %25 = arith.addf %23, %24 : vector<8x32xf32>
    %26 = math.tanh %25 : vector<8x32xf32>
    %27 = arith.mulf %21, %26 : vector<8x32xf32>
    %c0_16 = arith.constant 0 : index
    %c0_17 = arith.constant 0 : index
    %28 = vector.load %arg4[%c0_16, %c0_17] : memref<8x256xf32, #tpu.memory_space<vmem>>, vector<8x32xf32>
    tpu.vector_store %arg4[%c0_16, %c0_17], %27 {strides = array<i32>} : memref<8x256xf32, #tpu.memory_space<vmem>>, vector<8x32xf32>,
    %c8 = arith.constant 8 : index
    %c0_18 = arith.constant 0 : index
    %29 = vector.load %arg7[%c8, %c0_18] : memref<64x128xf32, #tpu.memory_space<vmem>>, vector<8x128xf32>
    %cst_19 = arith.constant dense<0.000000e+00> : vector<8x128xf32>
    %30 = tpu.matmul %27, %7, %cst_19 {dimension_numbers = #tpu.dot_dimension_numbers<[1], [0], [0], [1], [0, 0, 1, 1], [], []>} : vector<8x32xf32>, vector<32x128xf32>, vector<8x128xf32> -> vector<8x128xf32>
    %31 = arith.addf %29, %30 : vector<8x128xf32>
    %32 = math.tanh %31 : vector<8x128xf32>
    %33 = vector.extract_strided_slice %32 {offsets = [0, 0], sizes = [8, 96], strides = [1, 1]} : vector<8x128xf32> to vector<8x96xf32>
    %cst_20 = arith.constant 5.000000e-01 : f32
    %34 = vector.broadcast %cst_20 : f32 to vector<8x96xf32>
    %35 = arith.mulf %34, %33 : vector<8x96xf32>
    %cst_21 = arith.constant 5.000000e-01 : f32
    %36 = vector.broadcast %cst_21 : f32 to vector<8x96xf32>
    %37 = arith.addf %35, %36 : vector<8x96xf32>
    %38 = vector.extract_strided_slice %37 {offsets = [0, 0], sizes = [8, 32], strides = [1, 1]} : vector<8x96xf32> to vector<8x32xf32>
    %39 = vector.extract_strided_slice %37 {offsets = [0, 32], sizes = [8, 32], strides = [1, 1]} : vector<8x96xf32> to vector<8x32xf32>
    %40 = vector.extract_strided_slice %37 {offsets = [0, 64], sizes = [8, 32], strides = [1, 1]} : vector<8x96xf32> to vector<8x32xf32>
    %41 = vector.extract_strided_slice %32 {offsets = [0, 96], sizes = [8, 32], strides = [1, 1]} : vector<8x128xf32> to vector<8x32xf32>
    %42 = arith.mulf %39, %25 : vector<8x32xf32>
    %43 = arith.mulf %38, %41 : vector<8x32xf32>
    %44 = arith.addf %42, %43 : vector<8x32xf32>
    %45 = math.tanh %44 : vector<8x32xf32>
    %46 = arith.mulf %40, %45 : vector<8x32xf32>
    %c0_22 = arith.constant 0 : index
    %c32 = arith.constant 32 : index
    %47 = vector.load %arg4[%c0_22, %c32] : memref<8x256xf32, #tpu.memory_space<vmem>>, vector<8x32xf32>
    tpu.vector_store %arg4[%c0_22, %c32], %46 {strides = array<i32>} : memref<8x256xf32, #tpu.memory_space<vmem>>, vector<8x32xf32>,
    %c16 = arith.constant 16 : index
    %c0_23 = arith.constant 0 : index
    %48 = vector.load %arg7[%c16, %c0_23] : memref<64x128xf32, #tpu.memory_space<vmem>>, vector<8x128xf32>
    %cst_24 = arith.constant dense<0.000000e+00> : vector<8x128xf32>
    %49 = tpu.matmul %46, %7, %cst_24 {dimension_numbers = #tpu.dot_dimension_numbers<[1], [0], [0], [1], [0, 0, 1, 1], [], []>} : vector<8x32xf32>, vector<32x128xf32>, vector<8x128xf32> -> vector<8x128xf32>
    %50 = arith.addf %48, %49 : vector<8x128xf32>
    %51 = math.tanh %50 : vector<8x128xf32>
    %52 = vector.extract_strided_slice %51 {offsets = [0, 0], sizes = [8, 96], strides = [1, 1]} : vector<8x128xf32> to vector<8x96xf32>
    %cst_25 = arith.constant 5.000000e-01 : f32
    %53 = vector.broadcast %cst_25 : f32 to vector<8x96xf32>
    %54 = arith.mulf %53, %52 : vector<8x96xf32>
    %cst_26 = arith.constant 5.000000e-01 : f32
    %55 = vector.broadcast %cst_26 : f32 to vector<8x96xf32>
    %56 = arith.addf %54, %55 : vector<8x96xf32>
    %57 = vector.extract_strided_slice %56 {offsets = [0, 0], sizes = [8, 32], strides = [1, 1]} : vector<8x96xf32> to vector<8x32xf32>
    %58 = vector.extract_strided_slice %56 {offsets = [0, 32], sizes = [8, 32], strides = [1, 1]} : vector<8x96xf32> to vector<8x32xf32>
    %59 = vector.extract_strided_slice %56 {offsets = [0, 64], sizes = [8, 32], strides = [1, 1]} : vector<8x96xf32> to vector<8x32xf32>
    %60 = vector.extract_strided_slice %51 {offsets = [0, 96], sizes = [8, 32], strides = [1, 1]} : vector<8x128xf32> to vector<8x32xf32>
    %61 = arith.mulf %58, %44 : vector<8x32xf32>
    %62 = arith.mulf %57, %60 : vector<8x32xf32>
    %63 = arith.addf %61, %62 : vector<8x32xf32>
    %64 = math.tanh %63 : vector<8x32xf32>
    %65 = arith.mulf %59, %64 : vector<8x32xf32>
    %c0_27 = arith.constant 0 : index
    %c64 = arith.constant 64 : index
    %66 = vector.load %arg4[%c0_27, %c64] : memref<8x256xf32, #tpu.memory_space<vmem>>, vector<8x32xf32>
    tpu.vector_store %arg4[%c0_27, %c64], %65 {strides = array<i32>} : memref<8x256xf32, #tpu.memory_space<vmem>>, vector<8x32xf32>,
    %c24 = arith.constant 24 : index
    %c0_28 = arith.constant 0 : index
    %67 = vector.load %arg7[%c24, %c0_28] : memref<64x128xf32, #tpu.memory_space<vmem>>, vector<8x128xf32>
    %cst_29 = arith.constant dense<0.000000e+00> : vector<8x128xf32>
    %68 = tpu.matmul %65, %7, %cst_29 {dimension_numbers = #tpu.dot_dimension_numbers<[1], [0], [0], [1], [0, 0, 1, 1], [], []>} : vector<8x32xf32>, vector<32x128xf32>, vector<8x128xf32> -> vector<8x128xf32>
    %69 = arith.addf %67, %68 : vector<8x128xf32>
    %70 = math.tanh %69 : vector<8x128xf32>
    %71 = vector.extract_strided_slice %70 {offsets = [0, 0], sizes = [8, 96], strides = [1, 1]} : vector<8x128xf32> to vector<8x96xf32>
    %cst_30 = arith.constant 5.000000e-01 : f32
    %72 = vector.broadcast %cst_30 : f32 to vector<8x96xf32>
    %73 = arith.mulf %72, %71 : vector<8x96xf32>
    %cst_31 = arith.constant 5.000000e-01 : f32
    %74 = vector.broadcast %cst_31 : f32 to vector<8x96xf32>
    %75 = arith.addf %73, %74 : vector<8x96xf32>
    %76 = vector.extract_strided_slice %75 {offsets = [0, 0], sizes = [8, 32], strides = [1, 1]} : vector<8x96xf32> to vector<8x32xf32>
    %77 = vector.extract_strided_slice %75 {offsets = [0, 32], sizes = [8, 32], strides = [1, 1]} : vector<8x96xf32> to vector<8x32xf32>
    %78 = vector.extract_strided_slice %75 {offsets = [0, 64], sizes = [8, 32], strides = [1, 1]} : vector<8x96xf32> to vector<8x32xf32>
    %79 = vector.extract_strided_slice %70 {offsets = [0, 96], sizes = [8, 32], strides = [1, 1]} : vector<8x128xf32> to vector<8x32xf32>
    %80 = arith.mulf %77, %63 : vector<8x32xf32>
    %81 = arith.mulf %76, %79 : vector<8x32xf32>
    %82 = arith.addf %80, %81 : vector<8x32xf32>
    %83 = math.tanh %82 : vector<8x32xf32>
    %84 = arith.mulf %78, %83 : vector<8x32xf32>
    %c0_32 = arith.constant 0 : index
    %c96 = arith.constant 96 : index
    %85 = vector.load %arg4[%c0_32, %c96] : memref<8x256xf32, #tpu.memory_space<vmem>>, vector<8x32xf32>
    tpu.vector_store %arg4[%c0_32, %c96], %84 {strides = array<i32>} : memref<8x256xf32, #tpu.memory_space<vmem>>, vector<8x32xf32>,
    %c32_33 = arith.constant 32 : index
    %c0_34 = arith.constant 0 : index
    %86 = vector.load %arg7[%c32_33, %c0_34] : memref<64x128xf32, #tpu.memory_space<vmem>>, vector<8x128xf32>
    %cst_35 = arith.constant dense<0.000000e+00> : vector<8x128xf32>
    %87 = tpu.matmul %84, %7, %cst_35 {dimension_numbers = #tpu.dot_dimension_numbers<[1], [0], [0], [1], [0, 0, 1, 1], [], []>} : vector<8x32xf32>, vector<32x128xf32>, vector<8x128xf32> -> vector<8x128xf32>
    %88 = arith.addf %86, %87 : vector<8x128xf32>
    %89 = math.tanh %88 : vector<8x128xf32>
    %90 = vector.extract_strided_slice %89 {offsets = [0, 0], sizes = [8, 96], strides = [1, 1]} : vector<8x128xf32> to vector<8x96xf32>
    %cst_36 = arith.constant 5.000000e-01 : f32
    %91 = vector.broadcast %cst_36 : f32 to vector<8x96xf32>
    %92 = arith.mulf %91, %90 : vector<8x96xf32>
    %cst_37 = arith.constant 5.000000e-01 : f32
    %93 = vector.broadcast %cst_37 : f32 to vector<8x96xf32>
    %94 = arith.addf %92, %93 : vector<8x96xf32>
    %95 = vector.extract_strided_slice %94 {offsets = [0, 0], sizes = [8, 32], strides = [1, 1]} : vector<8x96xf32> to vector<8x32xf32>
    %96 = vector.extract_strided_slice %94 {offsets = [0, 32], sizes = [8, 32], strides = [1, 1]} : vector<8x96xf32> to vector<8x32xf32>
    %97 = vector.extract_strided_slice %94 {offsets = [0, 64], sizes = [8, 32], strides = [1, 1]} : vector<8x96xf32> to vector<8x32xf32>
    %98 = vector.extract_strided_slice %89 {offsets = [0, 96], sizes = [8, 32], strides = [1, 1]} : vector<8x128xf32> to vector<8x32xf32>
    %99 = arith.mulf %96, %82 : vector<8x32xf32>
    %100 = arith.mulf %95, %98 : vector<8x32xf32>
    %101 = arith.addf %99, %100 : vector<8x32xf32>
    %102 = math.tanh %101 : vector<8x32xf32>
    %103 = arith.mulf %97, %102 : vector<8x32xf32>
    %c0_38 = arith.constant 0 : index
    %c128 = arith.constant 128 : index
    %104 = vector.load %arg4[%c0_38, %c128] : memref<8x256xf32, #tpu.memory_space<vmem>>, vector<8x32xf32>
    tpu.vector_store %arg4[%c0_38, %c128], %103 {strides = array<i32>} : memref<8x256xf32, #tpu.memory_space<vmem>>, vector<8x32xf32>,
    %c40 = arith.constant 40 : index
    %c0_39 = arith.constant 0 : index
    %105 = vector.load %arg7[%c40, %c0_39] : memref<64x128xf32, #tpu.memory_space<vmem>>, vector<8x128xf32>
    %cst_40 = arith.constant dense<0.000000e+00> : vector<8x128xf32>
    %106 = tpu.matmul %103, %7, %cst_40 {dimension_numbers = #tpu.dot_dimension_numbers<[1], [0], [0], [1], [0, 0, 1, 1], [], []>} : vector<8x32xf32>, vector<32x128xf32>, vector<8x128xf32> -> vector<8x128xf32>
    %107 = arith.addf %105, %106 : vector<8x128xf32>
    %108 = math.tanh %107 : vector<8x128xf32>
    %109 = vector.extract_strided_slice %108 {offsets = [0, 0], sizes = [8, 96], strides = [1, 1]} : vector<8x128xf32> to vector<8x96xf32>
    %cst_41 = arith.constant 5.000000e-01 : f32
    %110 = vector.broadcast %cst_41 : f32 to vector<8x96xf32>
    %111 = arith.mulf %110, %109 : vector<8x96xf32>
    %cst_42 = arith.constant 5.000000e-01 : f32
    %112 = vector.broadcast %cst_42 : f32 to vector<8x96xf32>
    %113 = arith.addf %111, %112 : vector<8x96xf32>
    %114 = vector.extract_strided_slice %113 {offsets = [0, 0], sizes = [8, 32], strides = [1, 1]} : vector<8x96xf32> to vector<8x32xf32>
    %115 = vector.extract_strided_slice %113 {offsets = [0, 32], sizes = [8, 32], strides = [1, 1]} : vector<8x96xf32> to vector<8x32xf32>
    %116 = vector.extract_strided_slice %113 {offsets = [0, 64], sizes = [8, 32], strides = [1, 1]} : vector<8x96xf32> to vector<8x32xf32>
    %117 = vector.extract_strided_slice %108 {offsets = [0, 96], sizes = [8, 32], strides = [1, 1]} : vector<8x128xf32> to vector<8x32xf32>
    %118 = arith.mulf %115, %101 : vector<8x32xf32>
    %119 = arith.mulf %114, %117 : vector<8x32xf32>
    %120 = arith.addf %118, %119 : vector<8x32xf32>
    %121 = math.tanh %120 : vector<8x32xf32>
    %122 = arith.mulf %116, %121 : vector<8x32xf32>
    %c0_43 = arith.constant 0 : index
    %c160 = arith.constant 160 : index
    %123 = vector.load %arg4[%c0_43, %c160] : memref<8x256xf32, #tpu.memory_space<vmem>>, vector<8x32xf32>
    tpu.vector_store %arg4[%c0_43, %c160], %122 {strides = array<i32>} : memref<8x256xf32, #tpu.memory_space<vmem>>, vector<8x32xf32>,
    %c48 = arith.constant 48 : index
    %c0_44 = arith.constant 0 : index
    %124 = vector.load %arg7[%c48, %c0_44] : memref<64x128xf32, #tpu.memory_space<vmem>>, vector<8x128xf32>
    %cst_45 = arith.constant dense<0.000000e+00> : vector<8x128xf32>
    %125 = tpu.matmul %122, %7, %cst_45 {dimension_numbers = #tpu.dot_dimension_numbers<[1], [0], [0], [1], [0, 0, 1, 1], [], []>} : vector<8x32xf32>, vector<32x128xf32>, vector<8x128xf32> -> vector<8x128xf32>
    %126 = arith.addf %124, %125 : vector<8x128xf32>
    %127 = math.tanh %126 : vector<8x128xf32>
    %128 = vector.extract_strided_slice %127 {offsets = [0, 0], sizes = [8, 96], strides = [1, 1]} : vector<8x128xf32> to vector<8x96xf32>
    %cst_46 = arith.constant 5.000000e-01 : f32
    %129 = vector.broadcast %cst_46 : f32 to vector<8x96xf32>
    %130 = arith.mulf %129, %128 : vector<8x96xf32>
    %cst_47 = arith.constant 5.000000e-01 : f32
    %131 = vector.broadcast %cst_47 : f32 to vector<8x96xf32>
    %132 = arith.addf %130, %131 : vector<8x96xf32>
    %133 = vector.extract_strided_slice %132 {offsets = [0, 0], sizes = [8, 32], strides = [1, 1]} : vector<8x96xf32> to vector<8x32xf32>
    %134 = vector.extract_strided_slice %132 {offsets = [0, 32], sizes = [8, 32], strides = [1, 1]} : vector<8x96xf32> to vector<8x32xf32>
    %135 = vector.extract_strided_slice %132 {offsets = [0, 64], sizes = [8, 32], strides = [1, 1]} : vector<8x96xf32> to vector<8x32xf32>
    %136 = vector.extract_strided_slice %127 {offsets = [0, 96], sizes = [8, 32], strides = [1, 1]} : vector<8x128xf32> to vector<8x32xf32>
    %137 = arith.mulf %134, %120 : vector<8x32xf32>
    %138 = arith.mulf %133, %136 : vector<8x32xf32>
    %139 = arith.addf %137, %138 : vector<8x32xf32>
    %140 = math.tanh %139 : vector<8x32xf32>
    %141 = arith.mulf %135, %140 : vector<8x32xf32>
    %c0_48 = arith.constant 0 : index
    %c192 = arith.constant 192 : index
    %142 = vector.load %arg4[%c0_48, %c192] : memref<8x256xf32, #tpu.memory_space<vmem>>, vector<8x32xf32>
    tpu.vector_store %arg4[%c0_48, %c192], %141 {strides = array<i32>} : memref<8x256xf32, #tpu.memory_space<vmem>>, vector<8x32xf32>,
    %c56 = arith.constant 56 : index
    %c0_49 = arith.constant 0 : index
    %143 = vector.load %arg7[%c56, %c0_49] : memref<64x128xf32, #tpu.memory_space<vmem>>, vector<8x128xf32>
    %cst_50 = arith.constant dense<0.000000e+00> : vector<8x128xf32>
    %144 = tpu.matmul %141, %7, %cst_50 {dimension_numbers = #tpu.dot_dimension_numbers<[1], [0], [0], [1], [0, 0, 1, 1], [], []>} : vector<8x32xf32>, vector<32x128xf32>, vector<8x128xf32> -> vector<8x128xf32>
    %145 = arith.addf %143, %144 : vector<8x128xf32>
    %146 = math.tanh %145 : vector<8x128xf32>
    %147 = vector.extract_strided_slice %146 {offsets = [0, 0], sizes = [8, 96], strides = [1, 1]} : vector<8x128xf32> to vector<8x96xf32>
    %cst_51 = arith.constant 5.000000e-01 : f32
    %148 = vector.broadcast %cst_51 : f32 to vector<8x96xf32>
    %149 = arith.mulf %148, %147 : vector<8x96xf32>
    %cst_52 = arith.constant 5.000000e-01 : f32
    %150 = vector.broadcast %cst_52 : f32 to vector<8x96xf32>
    %151 = arith.addf %149, %150 : vector<8x96xf32>
    %152 = vector.extract_strided_slice %151 {offsets = [0, 0], sizes = [8, 32], strides = [1, 1]} : vector<8x96xf32> to vector<8x32xf32>
    %153 = vector.extract_strided_slice %151 {offsets = [0, 32], sizes = [8, 32], strides = [1, 1]} : vector<8x96xf32> to vector<8x32xf32>
    %154 = vector.extract_strided_slice %151 {offsets = [0, 64], sizes = [8, 32], strides = [1, 1]} : vector<8x96xf32> to vector<8x32xf32>
    %155 = vector.extract_strided_slice %146 {offsets = [0, 96], sizes = [8, 32], strides = [1, 1]} : vector<8x128xf32> to vector<8x32xf32>
    %156 = arith.mulf %153, %139 : vector<8x32xf32>
    %157 = arith.mulf %152, %155 : vector<8x32xf32>
    %158 = arith.addf %156, %157 : vector<8x32xf32>
    %159 = math.tanh %158 : vector<8x32xf32>
    %160 = arith.mulf %154, %159 : vector<8x32xf32>
    %c0_53 = arith.constant 0 : index
    %c224 = arith.constant 224 : index
    %161 = vector.load %arg4[%c0_53, %c224] : memref<8x256xf32, #tpu.memory_space<vmem>>, vector<8x32xf32>
    tpu.vector_store %arg4[%c0_53, %c224], %160 {strides = array<i32>} : memref<8x256xf32, #tpu.memory_space<vmem>>, vector<8x32xf32>,
    %c0_54 = arith.constant 0 : index
    %c0_55 = arith.constant 0 : index
    %162 = vector.load %arg5[%c0_54, %c0_55] : memref<8x32xf32, #tpu.memory_space<vmem>>, vector<8x32xf32>
    tpu.vector_store %arg5[%c0_54, %c0_55], %160 {strides = array<i32>} : memref<8x32xf32, #tpu.memory_space<vmem>>, vector<8x32xf32>,
    %c0_56 = arith.constant 0 : index
    %c0_57 = arith.constant 0 : index
    %163 = vector.load %arg6[%c0_56, %c0_57] : memref<8x32xf32, #tpu.memory_space<vmem>>, vector<8x32xf32>
    tpu.vector_store %arg6[%c0_56, %c0_57], %158 {strides = array<i32>} : memref<8x32xf32, #tpu.memory_space<vmem>>, vector<8x32xf32>,
    return
  }
}

</mosaic_0001>

<llo_original>
// kernel: encoder_forward.1
$region0: #{encoder_forward.1}
  #allocation0 [shape = 'u32[]', space=smem, size = 0x4, offset = 0x4, fixed_abs, tag = 'smem constant byte address 0x4 - core index']
  #allocation1 [shape = 'u32[72,128]{1,0:T(1,128)}', space=vmem, size = 0x9000, scoped, tag = 'internal scratch']
  #allocation2 [shape = 'f32[64,128]{1,0:T(8,128)}', space=vmem, size = 0x8000, scoped, tag = 'scratch operand']
  %s0 = inlined_call_operand.vmem [shape: f32[64,16], index: 0, kind: input, shape index: {}]
  %s1 = inlined_call_operand.vmem [shape: f32[16,128], index: 1, kind: input, shape index: {}]
  %s2 = inlined_call_operand.vmem [shape: f32[32,128], index: 2, kind: input, shape index: {}]
  %s3 = inlined_call_operand.vmem [shape: f32[1,128], index: 3, kind: input, shape index: {}]
  %s4 = inlined_call_operand.vmem [shape: f32[8,256], index: 4, kind: output, shape index: {0}]
  %s5 = inlined_call_operand.vmem [shape: f32[8,32], index: 5, kind: output, shape index: {1}]
  %s6 = inlined_call_operand.vmem [shape: f32[8,32], index: 6, kind: output, shape index: {2}]
  %7 = xla_tuple %s4, %s5, %s6
  %s8 = sld [smem:[#allocation0]]
  $region42: #{encoder_forward.1} parent=0
    _
  %s10 = ssub.s32 1, %s8
  %s11 = scalar_select 0, %s10, %s8
  // Predicated region
  $region2: #{encoder_forward.1} parent=0 // pred_check
    _
  $region3: #{encoder_forward.1} parent=0 // pred_check_branch
    %13 = sbr.rel (0) target = $region5
  $region4: #{encoder_forward.1} parent=0 // pred_region
    _
  $region5: #{encoder_forward.1} parent=0 // pred_fallthru
    _
  // Predicated region
  $region6: #{encoder_forward.1} parent=0 // pred_check
    _
  $region7: #{encoder_forward.1} parent=0 // pred_check_branch
    %15 = sbr.rel (0) target = $region9
  $region8: #{encoder_forward.1} parent=0 // pred_region
    _
  $region9: #{encoder_forward.1} parent=0 // pred_fallthru
    _
  // Predicated region
  $region10: #{encoder_forward.1} parent=0 // pred_check
    _
  $region11: #{encoder_forward.1} parent=0 // pred_check_branch
    %17 = sbr.rel (0) target = $region13
  $region12: #{encoder_forward.1} parent=0 // pred_region
    _
  $region13: #{encoder_forward.1} parent=0 // pred_fallthru
    _
  // Predicated region
  $region14: #{encoder_forward.1} parent=0 // pred_check
    _
  $region15: #{encoder_forward.1} parent=0 // pred_check_branch
    %19 = sbr.rel (0) target = $region17
  $region16: #{encoder_forward.1} parent=0 // pred_region
    _
  $region17: #{encoder_forward.1} parent=0 // pred_fallthru
    _
  %v20 = vld [vmem:[%s0] sm:$0xff]
  %v21 = vld [vmem:[%s0 + $0x8] sm:$0xff]
  %v22 = vld [vmem:[%s0 + $0x10] sm:$0xff]
  %v23 = vld [vmem:[%s0 + $0x18] sm:$0xff]
  %v24 = vld [vmem:[%s0 + $0x20] sm:$0xff]
  %v25 = vld [vmem:[%s0 + $0x28] sm:$0xff]
  %v26 = vld [vmem:[%s0 + $0x30] sm:$0xff]
  %v27 = vld [vmem:[%s0 + $0x38] sm:$0xff]
  %v28 = vld [vmem:[%s1] sm:$0xff]
  %v29 = vld [vmem:[%s1 + $0x8] sm:$0xff]
  %v30 = vld [vmem:[%s3] sm:$0x1]
  %v32 = vperm.slane %v30, 0
  %vm34 = vcmask 130048
  %v36 = vsel %vm34, %v20, 0
  %v39 = vsel %vm34, %v21, 0
  %v42 = vsel %vm34, %v22, 0
  %v45 = vsel %vm34, %v23, 0
  %v48 = vsel %vm34, %v24, 0
  %v51 = vsel %vm34, %v25, 0
  %v54 = vsel %vm34, %v26, 0
  %v57 = vsel %vm34, %v27, 0
  %59 = vmatpush.msra.mxu0 0.0
  %60 = vmatpush.msra.mxu0 0.0
  %61 = vmatpush.msra.mxu0 0.0
  %62 = vmatpush.msra.mxu0 0.0
  %63 = vmatpush.msra.mxu0 0.0
  %64 = vmatpush.msra.mxu0 0.0
  %65 = vmatpush.msra.mxu0 0.0
  %66 = vmatpush.msra.mxu0 0.0
  %67 = vmatpush.msra.mxu0 0.0
  %68 = vmatpush.msra.mxu0 0.0
  %69 = vmatpush.msra.mxu0 0.0
  %70 = vmatpush.msra.mxu0 0.0
  %71 = vmatpush.msra.mxu0 0.0
  %72 = vmatpush.msra.mxu0 0.0
  %73 = vmatpush.msra.mxu0 %v29
  %74 = vmatpush.msra.mxu0 %v28
  %75 = vmatmul.f32.gmra.mxu0 %v36
  %v76 = vpop.f32.mrf.mxu0
  %v77 = vadd.f32 %v32, %v76
  %78 = vmatmul.f32.gmra.mxu0 %v39
  %v79 = vpop.f32.mrf.mxu0
  %v80 = vadd.f32 %v32, %v79
  %81 = vmatmul.f32.gmra.mxu0 %v42
  %v82 = vpop.f32.mrf.mxu0
  %v83 = vadd.f32 %v32, %v82
  %84 = vmatmul.f32.gmra.mxu0 %v45
  %v85 = vpop.f32.mrf.mxu0
  %v86 = vadd.f32 %v32, %v85
  %87 = vmatmul.f32.gmra.mxu0 %v48
  %v88 = vpop.f32.mrf.mxu0
  %v89 = vadd.f32 %v32, %v88
  %90 = vmatmul.f32.gmra.mxu0 %v51
  %v91 = vpop.f32.mrf.mxu0
  %v92 = vadd.f32 %v32, %v91
  %93 = vmatmul.f32.gmra.mxu0 %v54
  %v94 = vpop.f32.mrf.mxu0
  %v95 = vadd.f32 %v32, %v94
  %96 = vmatmul.f32.gmra.mxu0 %v57
  %v97 = vpop.f32.mrf.mxu0
  %v98 = vadd.f32 %v32, %v97
  %99 = vdwg.mxu0
  %100 = vst [vmem:[#allocation2] sm:$0xff] %v77
  %101 = vst [vmem:[#allocation2 + $0x8] sm:$0xff] %v80
  %102 = vst [vmem:[#allocation2 + $0x10] sm:$0xff] %v83
  %103 = vst [vmem:[#allocation2 + $0x18] sm:$0xff] %v86
  %104 = vst [vmem:[#allocation2 + $0x20] sm:$0xff] %v89
  %105 = vst [vmem:[#allocation2 + $0x28] sm:$0xff] %v92
  %106 = vst [vmem:[#allocation2 + $0x30] sm:$0xff] %v95
  %107 = vst [vmem:[#allocation2 + $0x38] sm:$0xff] %v98
  %v108 = vld [vmem:[%s2] sm:$0xff]
  %v109 = vld [vmem:[%s2 + $0x8] sm:$0xff]
  %v110 = vld [vmem:[%s2 + $0x10] sm:$0xff]
  %v111 = vld [vmem:[%s2 + $0x18] sm:$0xff]
  %v112 = vld [vmem:[#allocation2] sm:$0xff]
  %vm113 = vcmask 261120
  %v115 = vsel %vm113, 0.0, 0
  %117 = vmatpush.msra.mxu0 0.0
  %118 = vmatpush.msra.mxu0 0.0
  %119 = vmatpush.msra.mxu0 0.0
  %120 = vmatpush.msra.mxu0 0.0
  %121 = vmatpush.msra.mxu0 0.0
  %122 = vmatpush.msra.mxu0 0.0
  %123 = vmatpush.msra.mxu0 0.0
  %124 = vmatpush.msra.mxu0 0.0
  %125 = vmatpush.msra.mxu0 0.0
  %126 = vmatpush.msra.mxu0 0.0
  %127 = vmatpush.msra.mxu0 0.0
  %128 = vmatpush.msra.mxu0 0.0
  %129 = vmatpush.msra.mxu0 %v111
  %130 = vmatpush.msra.mxu0 %v110
  %131 = vmatpush.msra.mxu0 %v109
  %132 = vmatpush.msra.mxu0 %v108
  %133 = vmatmul.f32.gmra.mxu0 %v115
  %v134 = vpop.f32.mrf.mxu0
  %v135 = vadd.f32 0.0, %v134
  %136 = vdwg.mxu0
  %v137 = vadd.f32 %v112, %v135
  %v138 = vtanh.pop %v137
  %v139 = vmul.f32 %v138, 0.5
  %v140 = vadd.f32 %v139, 0.5
  %v141 = vmul.f32 %v140, 0.0
  %143 = vrot.lane.b32.xlu0 %v138, 32
  %v144 = vpop.permute.xlu0 %143
  %v146 = vmul.f32 %v140, %v144
  %148 = vrot.lane.b32.xlu0 %v146, 32
  %v149 = vpop.permute.xlu0 %148
  %v151 = vadd.f32 %v141, %v149
  %v152 = vtanh.pop %v151
  %154 = vrot.lane.b32.xlu0 %v152, 32
  %v155 = vpop.permute.xlu0 %154
  %v157 = vmul.f32 %v140, %v155
  %159 = vrot.lane.b32.xlu0 %v157, 64
  %v160 = vpop.permute.xlu0 %159
  %162 = vst.msk [vmem:[%s4] sm:$0xff] %vm113, %v160
  %v163 = vld [vmem:[#allocation2 + $0x8] sm:$0xff]
  %v164 = vsel %vm113, %v160, 0
  %166 = vmatpush.msra.mxu0 0.0
  %167 = vmatpush.msra.mxu0 0.0
  %168 = vmatpush.msra.mxu0 0.0
  %169 = vmatpush.msra.mxu0 0.0
  %170 = vmatpush.msra.mxu0 0.0
  %171 = vmatpush.msra.mxu0 0.0
  %172 = vmatpush.msra.mxu0 0.0
  %173 = vmatpush.msra.mxu0 0.0
  %174 = vmatpush.msra.mxu0 0.0
  %175 = vmatpush.msra.mxu0 0.0
  %176 = vmatpush.msra.mxu0 0.0
  %177 = vmatpush.msra.mxu0 0.0
  %178 = vmatpush.msra.mxu0 %v111
  %179 = vmatpush.msra.mxu0 %v110
  %180 = vmatpush.msra.mxu0 %v109
  %181 = vmatpush.msra.mxu0 %v108
  %182 = vmatmul.f32.gmra.mxu0 %v164
  %v183 = vpop.f32.mrf.mxu0
  %v184 = vadd.f32 0.0, %v183
  %185 = vdwg.mxu0
  %v186 = vadd.f32 %v163, %v184
  %v187 = vtanh.pop %v186
  %v188 = vmul.f32 %v187, 0.5
  %v189 = vadd.f32 %v188, 0.5
  %v190 = vmul.f32 %v189, %v151
  %192 = vrot.lane.b32.xlu0 %v187, 32
  %v193 = vpop.permute.xlu0 %192
  %v195 = vmul.f32 %v189, %v193
  %197 = vrot.lane.b32.xlu0 %v195, 32
  %v198 = vpop.permute.xlu0 %197
  %v200 = vadd.f32 %v190, %v198
  %v201 = vtanh.pop %v200
  %203 = vrot.lane.b32.xlu0 %v201, 32
  %v204 = vpop.permute.xlu0 %203
  %v206 = vmul.f32 %v189, %v204
  %208 = vrot.lane.b32.xlu0 %v206, 96
  %v209 = vpop.permute.xlu0 %208
  %vm211 = vcmask 523520
  %212 = vst.msk [vmem:[%s4] sm:$0xff] %vm211, %v209
  %v213 = vld [vmem:[#allocation2 + $0x10] sm:$0xff]
  %214 = vrot.lane.b32.xlu0 %v206, 64
  %v215 = vpop.permute.xlu0 %214
  %v216 = vsel %vm113, %v215, 0
  %218 = vmatpush.msra.mxu0 0.0
  %219 = vmatpush.msra.mxu0 0.0
  %220 = vmatpush.msra.mxu0 0.0
  %221 = vmatpush.msra.mxu0 0.0
  %222 = vmatpush.msra.mxu0 0.0
  %223 = vmatpush.msra.mxu0 0.0
  %224 = vmatpush.msra.mxu0 0.0
  %225 = vmatpush.msra.mxu0 0.0
  %226 = vmatpush.msra.mxu0 0.0
  %227 = vmatpush.msra.mxu0 0.0
  %228 = vmatpush.msra.mxu0 0.0
  %229 = vmatpush.msra.mxu0 0.0
  %230 = vmatpush.msra.mxu0 %v111
  %231 = vmatpush.msra.mxu0 %v110
  %232 = vmatpush.msra.mxu0 %v109
  %233 = vmatpush.msra.mxu0 %v108
  %234 = vmatmul.f32.gmra.mxu0 %v216
  %v235 = vpop.f32.mrf.mxu0
  %v236 = vadd.f32 0.0, %v235
  %237 = vdwg.mxu0
  %v238 = vadd.f32 %v213, %v236
  %v239 = vtanh.pop %v238
  %v240 = vmul.f32 %v239, 0.5
  %v241 = vadd.f32 %v240, 0.5
  %v242 = vmul.f32 %v241, %v200
  %244 = vrot.lane.b32.xlu0 %v239, 32
  %v245 = vpop.permute.xlu0 %244
  %v247 = vmul.f32 %v241, %v245
  %249 = vrot.lane.b32.xlu0 %v247, 32
  %v250 = vpop.permute.xlu0 %249
  %v252 = vadd.f32 %v242, %v250
  %v253 = vtanh.pop %v252
  %255 = vrot.lane.b32.xlu0 %v253, 32
  %v256 = vpop.permute.xlu0 %255
  %v258 = vmul.f32 %v241, %v256
  %vm259 = vcmask 785920
  %260 = vst.msk [vmem:[%s4] sm:$0xff] %vm259, %v258
  %v261 = vld [vmem:[#allocation2 + $0x18] sm:$0xff]
  %263 = vrot.lane.b32.xlu0 %v258, 64
  %v264 = vpop.permute.xlu0 %263
  %v265 = vsel %vm113, %v264, 0
  %267 = vmatpush.msra.mxu0 0.0
  %268 = vmatpush.msra.mxu0 0.0
  %269 = vmatpush.msra.mxu0 0.0
  %270 = vmatpush.msra.mxu0 0.0
  %271 = vmatpush.msra.mxu0 0.0
  %272 = vmatpush.msra.mxu0 0.0
  %273 = vmatpush.msra.mxu0 0.0
  %274 = vmatpush.msra.mxu0 0.0
  %275 = vmatpush.msra.mxu0 0.0
  %276 = vmatpush.msra.mxu0 0.0
  %277 = vmatpush.msra.mxu0 0.0
  %278 = vmatpush.msra.mxu0 0.0
  %279 = vmatpush.msra.mxu0 %v111
  %280 = vmatpush.msra.mxu0 %v110
  %281 = vmatpush.msra.mxu0 %v109
  %282 = vmatpush.msra.mxu0 %v108
  %283 = vmatmul.f32.gmra.mxu0 %v265
  %v284 = vpop.f32.mrf.mxu0
  %v285 = vadd.f32 0.0, %v284
  %286 = vdwg.mxu0
  %v287 = vadd.f32 %v261, %v285
  %v288 = vtanh.pop %v287
  %v289 = vmul.f32 %v288, 0.5
  %v290 = vadd.f32 %v289, 0.5
  %v291 = vmul.f32 %v290, %v252
  %293 = vrot.lane.b32.xlu0 %v288, 32
  %v294 = vpop.permute.xlu0 %293
  %v296 = vmul.f32 %v290, %v294
  %298 = vrot.lane.b32.xlu0 %v296, 32
  %v299 = vpop.permute.xlu0 %298
  %v301 = vadd.f32 %v291, %v299
  %v302 = vtanh.pop %v301
  %304 = vrot.lane.b32.xlu0 %v302, 32
  %v305 = vpop.permute.xlu0 %304
  %v307 = vmul.f32 %v290, %v305
  %309 = vrot.lane.b32.xlu0 %v307, 32
  %v310 = vpop.permute.xlu0 %309
  %vm312 = vcmask 1048320
  %313 = vst.msk [vmem:[%s4] sm:$0xff] %vm312, %v310
  %v314 = vld [vmem:[#allocation2 + $0x20] sm:$0xff]
  %315 = vrot.lane.b32.xlu0 %v307, 64
  %v316 = vpop.permute.xlu0 %315
  %v317 = vsel %vm113, %v316, 0
  %319 = vmatpush.msra.mxu0 0.0
  %320 = vmatpush.msra.mxu0 0.0
  %321 = vmatpush.msra.mxu0 0.0
  %322 = vmatpush.msra.mxu0 0.0
  %323 = vmatpush.msra.mxu0 0.0
  %324 = vmatpush.msra.mxu0 0.0
  %325 = vmatpush.msra.mxu0 0.0
  %326 = vmatpush.msra.mxu0 0.0
  %327 = vmatpush.msra.mxu0 0.0
  %328 = vmatpush.msra.mxu0 0.0
  %329 = vmatpush.msra.mxu0 0.0
  %330 = vmatpush.msra.mxu0 0.0
  %331 = vmatpush.msra.mxu0 %v111
  %332 = vmatpush.msra.mxu0 %v110
  %333 = vmatpush.msra.mxu0 %v109
  %334 = vmatpush.msra.mxu0 %v108
  %335 = vmatmul.f32.gmra.mxu0 %v317
  %v336 = vpop.f32.mrf.mxu0
  %v337 = vadd.f32 0.0, %v336
  %338 = vdwg.mxu0
  %v339 = vadd.f32 %v314, %v337
  %v340 = vtanh.pop %v339
  %v341 = vmul.f32 %v340, 0.5
  %v342 = vadd.f32 %v341, 0.5
  %v343 = vmul.f32 %v342, %v301
  %345 = vrot.lane.b32.xlu0 %v340, 32
  %v346 = vpop.permute.xlu0 %345
  %v348 = vmul.f32 %v342, %v346
  %350 = vrot.lane.b32.xlu0 %v348, 32
  %v351 = vpop.permute.xlu0 %350
  %v353 = vadd.f32 %v343, %v351
  %v354 = vtanh.pop %v353
  %356 = vrot.lane.b32.xlu0 %v354, 32
  %v357 = vpop.permute.xlu0 %356
  %v359 = vmul.f32 %v342, %v357
  %361 = vrot.lane.b32.xlu0 %v359, 64
  %v362 = vpop.permute.xlu0 %361
  %364 = vst.msk [vmem:[%s4 + $0x8] sm:$0xff] %vm113, %v362
  %v365 = vld [vmem:[#allocation2 + $0x28] sm:$0xff]
  %v366 = vsel %vm113, %v362, 0
  %368 = vmatpush.msra.mxu0 0.0
  %369 = vmatpush.msra.mxu0 0.0
  %370 = vmatpush.msra.mxu0 0.0
  %371 = vmatpush.msra.mxu0 0.0
  %372 = vmatpush.msra.mxu0 0.0
  %373 = vmatpush.msra.mxu0 0.0
  %374 = vmatpush.msra.mxu0 0.0
  %375 = vmatpush.msra.mxu0 0.0
  %376 = vmatpush.msra.mxu0 0.0
  %377 = vmatpush.msra.mxu0 0.0
  %378 = vmatpush.msra.mxu0 0.0
  %379 = vmatpush.msra.mxu0 0.0
  %380 = vmatpush.msra.mxu0 %v111
  %381 = vmatpush.msra.mxu0 %v110
  %382 = vmatpush.msra.mxu0 %v109
  %383 = vmatpush.msra.mxu0 %v108
  %384 = vmatmul.f32.gmra.mxu0 %v366
  %v385 = vpop.f32.mrf.mxu0
  %v386 = vadd.f32 0.0, %v385
  %387 = vdwg.mxu0
  %v388 = vadd.f32 %v365, %v386
  %v389 = vtanh.pop %v388
  %v390 = vmul.f32 %v389, 0.5
  %v391 = vadd.f32 %v390, 0.5
  %v392 = vmul.f32 %v391, %v353
  %394 = vrot.lane.b32.xlu0 %v389, 32
  %v395 = vpop.permute.xlu0 %394
  %v397 = vmul.f32 %v391, %v395
  %399 = vrot.lane.b32.xlu0 %v397, 32
  %v400 = vpop.permute.xlu0 %399
  %v402 = vadd.f32 %v392, %v400
  %v403 = vtanh.pop %v402
  %405 = vrot.lane.b32.xlu0 %v403, 32
  %v406 = vpop.permute.xlu0 %405
  %v408 = vmul.f32 %v391, %v406
  %410 = vrot.lane.b32.xlu0 %v408, 96
  %v411 = vpop.permute.xlu0 %410
  %413 = vst.msk [vmem:[%s4 + $0x8] sm:$0xff] %vm211, %v411
  %v414 = vld [vmem:[#allocation2 + $0x30] sm:$0xff]
  %415 = vrot.lane.b32.xlu0 %v408, 64
  %v416 = vpop.permute.xlu0 %415
  %v417 = vsel %vm113, %v416, 0
  %419 = vmatpush.msra.mxu0 0.0
  %420 = vmatpush.msra.mxu0 0.0
  %421 = vmatpush.msra.mxu0 0.0
  %422 = vmatpush.msra.mxu0 0.0
  %423 = vmatpush.msra.mxu0 0.0
  %424 = vmatpush.msra.mxu0 0.0
  %425 = vmatpush.msra.mxu0 0.0
  %426 = vmatpush.msra.mxu0 0.0
  %427 = vmatpush.msra.mxu0 0.0
  %428 = vmatpush.msra.mxu0 0.0
  %429 = vmatpush.msra.mxu0 0.0
  %430 = vmatpush.msra.mxu0 0.0
  %431 = vmatpush.msra.mxu0 %v111
  %432 = vmatpush.msra.mxu0 %v110
  %433 = vmatpush.msra.mxu0 %v109
  %434 = vmatpush.msra.mxu0 %v108
  %435 = vmatmul.f32.gmra.mxu0 %v417
  %v436 = vpop.f32.mrf.mxu0
  %v437 = vadd.f32 0.0, %v436
  %438 = vdwg.mxu0
  %v439 = vadd.f32 %v414, %v437
  %v440 = vtanh.pop %v439
  %v441 = vmul.f32 %v440, 0.5
  %v442 = vadd.f32 %v441, 0.5
  %v443 = vmul.f32 %v442, %v402
  %445 = vrot.lane.b32.xlu0 %v440, 32
  %v446 = vpop.permute.xlu0 %445
  %v448 = vmul.f32 %v442, %v446
  %450 = vrot.lane.b32.xlu0 %v448, 32
  %v451 = vpop.permute.xlu0 %450
  %v453 = vadd.f32 %v443, %v451
  %v454 = vtanh.pop %v453
  %456 = vrot.lane.b32.xlu0 %v454, 32
  %v457 = vpop.permute.xlu0 %456
  %v459 = vmul.f32 %v442, %v457
  %460 = vst.msk [vmem:[%s4 + $0x8] sm:$0xff] %vm259, %v459
  %v461 = vld [vmem:[#allocation2 + $0x38] sm:$0xff]
  %463 = vrot.lane.b32.xlu0 %v459, 64
  %v464 = vpop.permute.xlu0 %463
  %v465 = vsel %vm113, %v464, 0
  %467 = vmatpush.msra.mxu0 0.0
  %468 = vmatpush.msra.mxu0 0.0
  %469 = vmatpush.msra.mxu0 0.0
  %470 = vmatpush.msra.mxu0 0.0
  %471 = vmatpush.msra.mxu0 0.0
  %472 = vmatpush.msra.mxu0 0.0
  %473 = vmatpush.msra.mxu0 0.0
  %474 = vmatpush.msra.mxu0 0.0
  %475 = vmatpush.msra.mxu0 0.0
  %476 = vmatpush.msra.mxu0 0.0
  %477 = vmatpush.msra.mxu0 0.0
  %478 = vmatpush.msra.mxu0 0.0
  %479 = vmatpush.msra.mxu0 %v111
  %480 = vmatpush.msra.mxu0 %v110
  %481 = vmatpush.msra.mxu0 %v109
  %482 = vmatpush.msra.mxu0 %v108
  %483 = vmatmul.f32.gmra.mxu0 %v465
  %v484 = vpop.f32.mrf.mxu0
  %v485 = vadd.f32 0.0, %v484
  %486 = vdwg.mxu0
  %v487 = vadd.f32 %v461, %v485
  %v488 = vtanh.pop %v487
  %v489 = vmul.f32 %v488, 0.5
  %v490 = vadd.f32 %v489, 0.5
  %v491 = vmul.f32 %v490, %v453
  %493 = vrot.lane.b32.xlu0 %v488, 32
  %v494 = vpop.permute.xlu0 %493
  %v496 = vmul.f32 %v490, %v494
  %498 = vrot.lane.b32.xlu0 %v496, 32
  %v499 = vpop.permute.xlu0 %498
  %v501 = vadd.f32 %v491, %v499
  %v502 = vtanh.pop %v501
  %504 = vrot.lane.b32.xlu0 %v502, 32
  %v505 = vpop.permute.xlu0 %504
  %v507 = vmul.f32 %v490, %v505
  %509 = vrot.lane.b32.xlu0 %v507, 32
  %v510 = vpop.permute.xlu0 %509
  %512 = vst.msk [vmem:[%s4 + $0x8] sm:$0xff] %vm312, %v510
  %513 = vrot.lane.b32.xlu0 %v507, 64
  %v514 = vpop.permute.xlu0 %513
  %516 = vst.msk [vmem:[%s5] sm:$0xff] %vm113, %v514
  %518 = vrot.lane.b32.xlu0 %v501, 96
  %v519 = vpop.permute.xlu0 %518
  %521 = vst.msk [vmem:[%s6] sm:$0xff] %vm113, %v519
  // Predicated region
  $region18: #{encoder_forward.1} parent=0 // pred_check
    _
  $region19: #{encoder_forward.1} parent=0 // pred_check_branch
    %523 = sbr.rel (0) target = $region21
  $region20: #{encoder_forward.1} parent=0 // pred_region
    _
  $region21: #{encoder_forward.1} parent=0 // pred_fallthru
    _
  // Predicated region
  $region22: #{encoder_forward.1} parent=0 // pred_check
    _
  $region23: #{encoder_forward.1} parent=0 // pred_check_branch
    %525 = sbr.rel (0) target = $region25
  $region24: #{encoder_forward.1} parent=0 // pred_region
    _
  $region25: #{encoder_forward.1} parent=0 // pred_fallthru
    _
  // Predicated region
  $region26: #{encoder_forward.1} parent=0 // pred_check
    _
  $region27: #{encoder_forward.1} parent=0 // pred_check_branch
    %527 = sbr.rel (0) target = $region29
  $region28: #{encoder_forward.1} parent=0 // pred_region
    _
  $region29: #{encoder_forward.1} parent=0 // pred_fallthru
    _
  // Predicated region
  $region30: #{encoder_forward.1} parent=0 // pred_check
    _
  $region31: #{encoder_forward.1} parent=0 // pred_check_branch
    %529 = sbr.rel (0) target = $region33
  $region32: #{encoder_forward.1} parent=0 // pred_region
    _
  $region33: #{encoder_forward.1} parent=0 // pred_fallthru
    _
  // Predicated region
  $region34: #{encoder_forward.1} parent=0 // pred_check
    _
  $region35: #{encoder_forward.1} parent=0 // pred_check_branch
    %531 = sbr.rel (0) target = $region37
  $region36: #{encoder_forward.1} parent=0 // pred_region
    _
  $region37: #{encoder_forward.1} parent=0 // pred_fallthru
    _
  // Predicated region
  $region38: #{encoder_forward.1} parent=0 // pred_check
    _
  $region39: #{encoder_forward.1} parent=0 // pred_check_branch
    %533 = sbr.rel (0) target = $region41
  $region40: #{encoder_forward.1} parent=0 // pred_region
    _
  $region41: #{encoder_forward.1} parent=0 // pred_fallthru
    _

</llo_original>
